<compile_context>
chip_gen: v7x
topology: tpu7x:2x2x1
jax: 0.10.0
libtpu: 0.0.40
codegen_flags: <defaults>
</compile_context>

<pallas_src>
import jax
import jax.numpy as jnp
import numpy as np
from jax.experimental import pallas as pl
from jax.experimental.pallas import tpu as pltpu

_BIG = 1e30            # sentinel; representable in f32 and bf16, |diff| <= 2e30
_LANES = 128
_GROUPS_PER_BLOCK = 8  # 128-lane column groups accumulated in compute dtype
                       # before folding into the f32 accumulator


def _round_up(x, m):
    return (x + m - 1) // m * m


def _cdiv(a, b):
    return (a + b - 1) // b


def _default_compute_dtype():
    """bf16 VPU path exists on v6e/v7x; fall back to f32 elsewhere (v5e, ...)."""
    try:
        kind = jax.devices()[0].device_kind.lower()
    except Exception:
        return jnp.float32
    if ("v6" in kind) or ("v7" in kind):
        return jnp.bfloat16
    return jnp.float32


def _margin_loss_kernel(dcol_ref, drow_ref, out_ref):
    """Per-row-tile hinge sums, accumulated lane-wise.

    dcol_ref: (TM, 128) compute dtype -- positives + margin replicated across
              the 128 lanes; -BIG for negatives / row padding.
    drow_ref: (G, 128)  compute dtype -- negatives laid out as G groups of 128
              columns; +BIG for positives / column padding.  Full array,
              resident across the whole grid (constant index_map).
    out_ref : (TM, 128) f32 -- out[i, l] = sum_g relu(dcol[i] - drow[g, l]).
    """
    tm = dcol_ref.shape[0]
    n_groups = drow_ref.shape[0]
    n_blocks = n_groups // _GROUPS_PER_BLOCK

    dcol = dcol_ref[...]  # hoisted: loaded once per row tile, stays in vregs

    def outer(b, acc):
        g0 = pl.multiple_of(b * _GROUPS_PER_BLOCK, _GROUPS_PER_BLOCK)
        # Partial sum over _GROUPS_PER_BLOCK column groups in compute dtype.
        # Statically unrolled; sub/max/add all stay in vregs (no VMEM temps).
        part = jnp.maximum(dcol - drow_ref[pl.ds(g0, 1), :], 0.0)
        for k in range(1, _GROUPS_PER_BLOCK):
            part = part + jnp.maximum(dcol - drow_ref[pl.ds(g0 + k, 1), :], 0.0)
        return acc + part.astype(jnp.float32)

    acc = jax.lax.fori_loop(
        0, n_blocks, outer, jnp.zeros((tm, _LANES), jnp.float32))
    out_ref[...] = acc  # single dense (TM, 128) store per row tile


def margin_loss(dist_arr, labels, margin, *, tm=128, min_kernel_n=2048,
                compute_dtype=None):
    """dist_arr: [N] float, labels: [N] bool. Returns scalar f32 loss.

    NOTE: if there are no positives or no negatives the result is NaN (0/0),
    mirroring the degenerate empty-gather mean of the PyTorch reference.
    """
    n = int(dist_arr.shape[0])
    d = dist_arr.astype(jnp.float32)
    labels = labels.astype(bool)
    margin = jnp.float32(margin)

    # Fold margin into the positive operand; sentinel-mask everything else so
    # relu() of every non-(pos, neg) pair (and all padding) is exactly 0.
    dcol = jnp.where(labels, d + margin, -_BIG)   # row operand : positives
    drow = jnp.where(labels, _BIG, d)             # col operand : negatives

    n_pos = jnp.sum(labels.astype(jnp.float32))
    n_neg = jnp.float32(n) - n_pos
    denom = n_pos * n_neg

    # Small-N fast path: pallas_call launch + per-step overhead dominates
    # until the N^2 VALU work is a few thousand elements wide.
    if n < min_kernel_n:
        hinge = jnp.maximum(dcol[:, None] - drow[None, :], 0.0)
        return jnp.sum(hinge) / denom

    if compute_dtype is None:
        compute_dtype = _default_compute_dtype()
    compute_dtype = jnp.dtype(compute_dtype)

    # ---- tiling ----------------------------------------------------------
    n_pad8 = _round_up(n, 8)
    tm = max(8, min(_round_up(tm, 8), n_pad8))
    # v7x megacore: make sure the "parallel" row axis has >= 2 tiles.
    if n_pad8 > 8 and _cdiv(n_pad8, tm) < 2:
        tm = _round_up(_cdiv(n_pad8, 2), 8)
    n_rows = _round_up(n, tm)
    n_cols = _round_up(n, _LANES * _GROUPS_PER_BLOCK)
    n_groups = n_cols // _LANES

    # Lane-dense operands: dcol replicated across the 128 lanes so the inner
    # op is dense vreg (-) vreg with only a cheap sublane broadcast of each
    # drow group; drow reshaped to (groups, 128) so each group is one dense
    # sublane row.  Padding uses sentinels so it contributes exactly 0.
    dcol_p = jnp.pad(dcol, (0, n_rows - n), constant_values=-_BIG)
    dcol_rep = jnp.broadcast_to(
        dcol_p.astype(compute_dtype)[:, None], (n_rows, _LANES))
    drow_p = jnp.pad(drow, (0, n_cols - n), constant_values=_BIG)
    drow_g = drow_p.astype(compute_dtype).reshape(n_groups, _LANES)

    grid = (n_rows // tm,)
    row_lane_sums = pl.pallas_call(
        _margin_loss_kernel,
        out_shape=jax.ShapeDtypeStruct((n_rows, _LANES), jnp.float32),
        grid=grid,
        in_specs=[
            pl.BlockSpec((tm, _LANES), lambda i: (i, 0)),
            pl.BlockSpec((n_groups, _LANES), lambda i: (0, 0)),  # resident
        ],
        out_specs=pl.BlockSpec((tm, _LANES), lambda i: (i, 0)),
        compiler_params=pltpu.CompilerParams(
            dimension_semantics=("parallel",),
            vmem_limit_bytes=48 * 1024 * 1024,
        ),
    )(dcol_rep, drow_g)

    # O(N) reduction + normalization done once in XLA, outside the kernel.
    return jnp.sum(row_lane_sums) / denom


def _margin_loss_ref(dist_arr, labels, margin):
    d = np.asarray(dist_arr, dtype=np.float32)
    lab = np.asarray(labels, dtype=bool)
    mat = d[lab][:, None] - d[~lab][None, :] + margin
    return np.maximum(mat, 0.0).mean()


if __name__ == "__main__":
    k1, k2, k3 = jax.random.split(jax.random.PRNGKey(0), 3)

    # Test 1: tiny input -> exercises the XLA small-N fast path (default).
    n1 = 8
    d1 = jax.random.normal(k1, (n1,), dtype=jnp.float32)
    lab1 = jnp.array([True, False, True, False, True, True, False, False])
    loss1 = jax.block_until_ready(margin_loss(d1, lab1, 1.0))
    ref1 = _margin_loss_ref(np.array(d1), np.array(lab1), 1.0)
    assert np.allclose(np.array(loss1), ref1, rtol=1e-5, atol=1e-6), (loss1, ref1)

    # Test 2: force the Pallas kernel (f32 compute) on a small padded problem:
    # 2 row tiles, padded rows + columns, full sentinel masking.
    n2 = 200
    d2 = jax.random.normal(k2, (n2,), dtype=jnp.float32)
    lab2 = (jnp.arange(n2) % 3) == 0
    loss2 = jax.block_until_ready(
        margin_loss(d2, lab2, 0.5, min_kernel_n=0, compute_dtype=jnp.float32))
    ref2 = _margin_loss_ref(np.array(d2), np.array(lab2), 0.5)
    assert np.allclose(np.array(loss2), ref2, rtol=1e-4, atol=1e-5), (loss2, ref2)

    # Test 3: kernel with the auto compute dtype (bf16 on v6e/v7x, f32 on
    # v5e/older) and multiple column blocks / row tiles; loose tolerance to
    # cover the bf16 path.
    n3 = 1536
    d3 = jax.random.normal(k3, (n3,), dtype=jnp.float32)
    lab3 = (jnp.arange(n3) % 4) == 0
    loss3 = jax.block_until_ready(margin_loss(d3, lab3, 0.7, min_kernel_n=0))
    ref3 = _margin_loss_ref(np.array(d3), np.array(lab3), 0.7)
    assert np.allclose(np.array(loss3), ref3, rtol=3e-2, atol=1e-3), (loss3, ref3)

    print("KERNEL_OK")
</pallas_src>

<mosaic_0001>
module attributes {stable_mosaic.version = 11 : i64} {
  func.func @_margin_loss_kernel(%arg0: i32, %arg1: memref<128x128xf32, #tpu.memory_space<vmem>>, %arg2: memref<8x128xf32, #tpu.memory_space<vmem>>, %arg3: memref<128x128xf32, #tpu.memory_space<vmem>>) attributes {dimension_semantics = [#tpu.dimension_semantics<parallel>], iteration_bounds = array<i64: 2>, scalar_prefetch = 0 : i64, scratch_operands = 0 : i64, tpu.core_type = #tpu.core_type<tc>, window_params = [{transform_indices = @transform_0, window_bounds = array<i64: 128, 128>}, {pipeline_mode = #tpu.pipeline_mode<synchronous>, transform_indices = @transform_1, window_bounds = array<i64: 8, 128>}, {transform_indices = @transform_2, window_bounds = array<i64: 128, 128>}]} {
    %c0 = arith.constant 0 : index
    %c0_0 = arith.constant 0 : index
    %0 = vector.load %arg1[%c0, %c0_0] : memref<128x128xf32, #tpu.memory_space<vmem>>, vector<128x128xf32>
    %cst = arith.constant 0.000000e+00 : f32
    %1 = vector.broadcast %cst : f32 to vector<128x128xf32>
    %c0_i32 = arith.constant 0 : i32
    %c8_i32 = arith.constant 8 : i32
    %2 = arith.muli %c0_i32, %c8_i32 : i32
    %3 = tpu.assume_multiple %2, 8 : i32
    %4 = arith.index_cast %3 : i32 to index
    %c0_1 = arith.constant 0 : index
    %5 = vector.load %arg2[%4, %c0_1] : memref<8x128xf32, #tpu.memory_space<vmem>>, vector<1x128xf32>
    %6 = vector.broadcast %5 : vector<1x128xf32> to vector<128x128xf32>
    %7 = arith.subf %0, %6 : vector<128x128xf32>
    %cst_2 = arith.constant 0.000000e+00 : f32
    %8 = vector.broadcast %cst_2 : f32 to vector<128x128xf32>
    %9 = arith.maximumf %7, %8 : vector<128x128xf32>
    %c1_i32 = arith.constant 1 : i32
    %10 = arith.addi %3, %c1_i32 : i32
    %11 = arith.index_cast %10 : i32 to index
    %c0_3 = arith.constant 0 : index
    %12 = vector.load %arg2[%11, %c0_3] : memref<8x128xf32, #tpu.memory_space<vmem>>, vector<1x128xf32>
    %13 = vector.broadcast %12 : vector<1x128xf32> to vector<128x128xf32>
    %14 = arith.subf %0, %13 : vector<128x128xf32>
    %cst_4 = arith.constant 0.000000e+00 : f32
    %15 = vector.broadcast %cst_4 : f32 to vector<128x128xf32>
    %16 = arith.maximumf %14, %15 : vector<128x128xf32>
    %17 = arith.addf %9, %16 : vector<128x128xf32>
    %c2_i32 = arith.constant 2 : i32
    %18 = arith.addi %3, %c2_i32 : i32
    %19 = arith.index_cast %18 : i32 to index
    %c0_5 = arith.constant 0 : index
    %20 = vector.load %arg2[%19, %c0_5] : memref<8x128xf32, #tpu.memory_space<vmem>>, vector<1x128xf32>
    %21 = vector.broadcast %20 : vector<1x128xf32> to vector<128x128xf32>
    %22 = arith.subf %0, %21 : vector<128x128xf32>
    %cst_6 = arith.constant 0.000000e+00 : f32
    %23 = vector.broadcast %cst_6 : f32 to vector<128x128xf32>
    %24 = arith.maximumf %22, %23 : vector<128x128xf32>
    %25 = arith.addf %17, %24 : vector<128x128xf32>
    %c3_i32 = arith.constant 3 : i32
    %26 = arith.addi %3, %c3_i32 : i32
    %27 = arith.index_cast %26 : i32 to index
    %c0_7 = arith.constant 0 : index
    %28 = vector.load %arg2[%27, %c0_7] : memref<8x128xf32, #tpu.memory_space<vmem>>, vector<1x128xf32>
    %29 = vector.broadcast %28 : vector<1x128xf32> to vector<128x128xf32>
    %30 = arith.subf %0, %29 : vector<128x128xf32>
    %cst_8 = arith.constant 0.000000e+00 : f32
    %31 = vector.broadcast %cst_8 : f32 to vector<128x128xf32>
    %32 = arith.maximumf %30, %31 : vector<128x128xf32>
    %33 = arith.addf %25, %32 : vector<128x128xf32>
    %c4_i32 = arith.constant 4 : i32
    %34 = arith.addi %3, %c4_i32 : i32
    %35 = arith.index_cast %34 : i32 to index
    %c0_9 = arith.constant 0 : index
    %36 = vector.load %arg2[%35, %c0_9] : memref<8x128xf32, #tpu.memory_space<vmem>>, vector<1x128xf32>
    %37 = vector.broadcast %36 : vector<1x128xf32> to vector<128x128xf32>
    %38 = arith.subf %0, %37 : vector<128x128xf32>
    %cst_10 = arith.constant 0.000000e+00 : f32
    %39 = vector.broadcast %cst_10 : f32 to vector<128x128xf32>
    %40 = arith.maximumf %38, %39 : vector<128x128xf32>
    %41 = arith.addf %33, %40 : vector<128x128xf32>
    %c5_i32 = arith.constant 5 : i32
    %42 = arith.addi %3, %c5_i32 : i32
    %43 = arith.index_cast %42 : i32 to index
    %c0_11 = arith.constant 0 : index
    %44 = vector.load %arg2[%43, %c0_11] : memref<8x128xf32, #tpu.memory_space<vmem>>, vector<1x128xf32>
    %45 = vector.broadcast %44 : vector<1x128xf32> to vector<128x128xf32>
    %46 = arith.subf %0, %45 : vector<128x128xf32>
    %cst_12 = arith.constant 0.000000e+00 : f32
    %47 = vector.broadcast %cst_12 : f32 to vector<128x128xf32>
    %48 = arith.maximumf %46, %47 : vector<128x128xf32>
    %49 = arith.addf %41, %48 : vector<128x128xf32>
    %c6_i32 = arith.constant 6 : i32
    %50 = arith.addi %3, %c6_i32 : i32
    %51 = arith.index_cast %50 : i32 to index
    %c0_13 = arith.constant 0 : index
    %52 = vector.load %arg2[%51, %c0_13] : memref<8x128xf32, #tpu.memory_space<vmem>>, vector<1x128xf32>
    %53 = vector.broadcast %52 : vector<1x128xf32> to vector<128x128xf32>
    %54 = arith.subf %0, %53 : vector<128x128xf32>
    %cst_14 = arith.constant 0.000000e+00 : f32
    %55 = vector.broadcast %cst_14 : f32 to vector<128x128xf32>
    %56 = arith.maximumf %54, %55 : vector<128x128xf32>
    %57 = arith.addf %49, %56 : vector<128x128xf32>
    %c7_i32 = arith.constant 7 : i32
    %58 = arith.addi %3, %c7_i32 : i32
    %59 = arith.index_cast %58 : i32 to index
    %c0_15 = arith.constant 0 : index
    %60 = vector.load %arg2[%59, %c0_15] : memref<8x128xf32, #tpu.memory_space<vmem>>, vector<1x128xf32>
    %61 = vector.broadcast %60 : vector<1x128xf32> to vector<128x128xf32>
    %62 = arith.subf %0, %61 : vector<128x128xf32>
    %cst_16 = arith.constant 0.000000e+00 : f32
    %63 = vector.broadcast %cst_16 : f32 to vector<128x128xf32>
    %64 = arith.maximumf %62, %63 : vector<128x128xf32>
    %65 = arith.addf %57, %64 : vector<128x128xf32>
    %66 = arith.addf %1, %65 : vector<128x128xf32>
    %c1_i32_17 = arith.constant 1 : i32
    %c0_18 = arith.constant 0 : index
    %c0_19 = arith.constant 0 : index
    %67 = vector.load %arg3[%c0_18, %c0_19] : memref<128x128xf32, #tpu.memory_space<vmem>>, vector<128x128xf32>
    tpu.vector_store %arg3[%c0_18, %c0_19], %66 {strides = array<i32>} : memref<128x128xf32, #tpu.memory_space<vmem>>, vector<128x128xf32>,
    return
  }
  func.func @transform_0(%arg0: i32) -> (i32, i32) {
    %c0_i32 = arith.constant 0 : i32
    %c0_i32_0 = arith.constant 0 : i32
    return %arg0, %c0_i32 : i32, i32
  }
  func.func @transform_1(%arg0: i32) -> (i32, i32) {
    %c0_i32 = arith.constant 0 : i32
    %c0_i32_0 = arith.constant 0 : i32
    %c0_i32_1 = arith.constant 0 : i32
    return %c0_i32, %c0_i32_0 : i32, i32
  }
  func.func @transform_2(%arg0: i32) -> (i32, i32) {
    %c0_i32 = arith.constant 0 : i32
    %c0_i32_0 = arith.constant 0 : i32
    return %arg0, %c0_i32 : i32, i32
  }
}

</mosaic_0001>

<llo_original>
// kernel: tpu_custom_call.1
$region0: #{tpu_custom_call.1}
  #allocation0 [shape = 'u32[]', space=smem, size = 0x4, offset = 0x4, fixed_abs, tag = 'smem constant byte address 0x4 - core index']
  #allocation1 [shape = 'u32[144,128]{1,0:T(1,128)}', space=vmem, size = 0x12000, scoped, tag = 'internal scratch']
  %s0 = inlined_call_operand.hbm [shape: f32[256,128], index: 0, kind: input, shape index: {}]
  %s1 = inlined_call_operand.hbm [shape: f32[8,128], index: 1, kind: input, shape index: {}]
  %s2 = inlined_call_operand.hbm [shape: f32[256,128], index: 2, kind: output, shape index: {}]
  %s3 = sld [smem:[#allocation0]]
  $region49: #{tpu_custom_call.1} parent=0
    _
  %s5 = ssub.s32 1, %s3
  %s6 = scalar_select 0, %s5, %s3
  $region1: #{tpu_custom_call.1} parent=0
    #allocation2 [shape = 'u8[131072]{0}', space=vmem, size = 0x20000, scoped, tag = 'input window, operand 0']
    #allocation3 [shape = 's32[2]{0}', space=sflag, size = 0x8, scoped, tag = 'scoped memory for tpu_custom_call.1']
    #allocation4 [shape = 's32[2]{0}', space=sflag, size = 0x8, scoped, tag = 'scoped memory for tpu_custom_call.1']
    #allocation5 [shape = 'u8[4096]{0}', space=vmem, size = 0x1000, scoped, tag = 'input window, operand 1, single buffered']
    #allocation6 [shape = 's32[1]{0}', space=sflag, size = 0x4, scoped, tag = 'scoped memory for tpu_custom_call.1']
    #allocation7 [shape = 'u8[131072]{0}', space=vmem, size = 0x20000, scoped, tag = 'output window, operand 0']
    %7 = vsyncpa [#allocation3], 0
    %s8 = scalar_lea.sflag [#allocation3], 1
    %9 = vsyncpa %s8, 0
    %10 = vsyncpa [#allocation6], 0
    %11 = vsyncpa [#allocation4], 0
    %s12 = scalar_lea.sflag [#allocation4], 1
    %13 = vsyncpa %s12, 0
    loop: start=0, step=1, limit=4
    $region2: #{tpu_custom_call.1} parent=1 // loop_pre_header
      _
    $region3: #{tpu_custom_call.1} parent=1 // loop_header
      %s15 = sphi 0, %s19
      %p16 = scmp.ge.s32.totalorder %s15, 4
      %s25 = sphi 0, %s27
      %s28 = sphi 0, %s25
      %s29 = sphi 0, %s28
      %s45 = sphi 0, %s29
      %s49 = sphi 0, %s49
      %s51 = sphi 0, %s49
      %s52 = sphi 0, %s51
      %s66 = sphi 0, %s52
      %s72 = sphi 0, %s74
      %s75 = sphi 0, %s72
      %s76 = sphi 0, %s75
      %s92 = sphi 0, %s76
    $region4: #{tpu_custom_call.1} parent=1 // loop_header_branch
      %18 = sbr.rel (%p16) target = $region8
    $region5: #{tpu_custom_call.1} parent=1 // loop_body
      %s20 = ssub.s32 %s15, 1
      %s21 = ssub.s32 %s15, 2
      %s22 = sadd.s32 %s15, 1
      %s23 = ssub.s32 %s15, %s22
      %p24 = scmp.eq.s32.totalorder %s23, 0
      %s26 = sadd.s32 %s25, 1
      %s27 = scalar_select %p24, %s25, %s26
      %p30 = pneg %p24
      %p31 = scmp.eq.s32.totalorder %s15, 1
      %p32 = por %p30, %p31
      %p33 = scmp.ne.s32.totalorder %s25, %s28
      %p34 = scmp.eq.s32.totalorder %s15, 0
      %p35 = por %p33, %p34
      %p36 = scmp.ne.s32.totalorder %s25, %s28
      %p37 = scmp.eq.s32.totalorder %s20, 1
      %p38 = por %p36, %p37
      %p39 = scmp.ne.s32.totalorder %s28, %s29
      %p40 = scmp.eq.s32.totalorder %s20, 0
      %p41 = por %p39, %p40
      %p42 = scmp.ne.s32.totalorder %s28, %s29
      %p43 = scmp.eq.s32.totalorder %s21, 1
      %p44 = por %p42, %p43
      %p46 = scmp.ne.s32.totalorder %s29, %s45
      %p47 = scmp.eq.s32.totalorder %s21, 0
      %p48 = por %p46, %p47
      %s50 = sadd.s32 %s49, 1
      %p53 = scmp.eq.s32.totalorder %s15, 1
      %p54 = scmp.ne.s32.totalorder %s49, %s51
      %p55 = scmp.eq.s32.totalorder %s15, 0
      %p56 = por %p54, %p55
      %p57 = scmp.ne.s32.totalorder %s49, %s51
      %p58 = scmp.eq.s32.totalorder %s20, 1
      %p59 = por %p57, %p58
      %p60 = scmp.ne.s32.totalorder %s51, %s52
      %p61 = scmp.eq.s32.totalorder %s20, 0
      %p62 = por %p60, %p61
      %p63 = scmp.ne.s32.totalorder %s51, %s52
      %p64 = scmp.eq.s32.totalorder %s21, 1
      %p65 = por %p63, %p64
      %p67 = scmp.ne.s32.totalorder %s52, %s66
      %p68 = scmp.eq.s32.totalorder %s21, 0
      %p69 = por %p67, %p68
      %s70 = ssub.s32 %s15, %s22
      %p71 = scmp.eq.s32.totalorder %s70, 0
      %s73 = sadd.s32 %s72, 1
      %s74 = scalar_select %p71, %s72, %s73
      %p77 = pneg %p71
      %p78 = scmp.eq.s32.totalorder %s15, 1
      %p79 = por %p77, %p78
      %p80 = scmp.ne.s32.totalorder %s72, %s75
      %p81 = scmp.eq.s32.totalorder %s15, 0
      %p82 = por %p80, %p81
      %p83 = scmp.ne.s32.totalorder %s72, %s75
      %p84 = scmp.eq.s32.totalorder %s20, 1
      %p85 = por %p83, %p84
      %p86 = scmp.ne.s32.totalorder %s75, %s76
      %p87 = scmp.eq.s32.totalorder %s20, 0
      %p88 = por %p86, %p87
      %p89 = scmp.ne.s32.totalorder %s75, %s76
      %p90 = scmp.eq.s32.totalorder %s21, 1
      %p91 = por %p89, %p90
      %p93 = scmp.ne.s32.totalorder %s76, %s92
      %p94 = scmp.eq.s32.totalorder %s21, 0
      %p95 = por %p93, %p94
      %p96 = scmp.le.s32.totalorder 1, %s15
      %p97 = scmp.lt.s32.totalorder %s15, 3
      %p98 = pnand %p96, %p97
      %p99 = pneg %p98
      // Predicated region
      $region9: #{tpu_custom_call.1} parent=5 // pred_check
        _
      $region10: #{tpu_custom_call.1} parent=5 // pred_check_branch
        %101 = sbr.rel (%p98) target = $region12
      $region11: #{tpu_custom_call.1} parent=5 // pred_region
        %s102 = ssub.s32 %s15, 1
        // Predicated region
        $region13: #{tpu_custom_call.1} parent=11 // pred_check
          %p103 = pneg %p62
        $region14: #{tpu_custom_call.1} parent=11 // pred_check_branch
          %105 = sbr.rel (%p103) target = $region16
        $region15: #{tpu_custom_call.1} parent=11 // pred_region
          %s107 = ssub.s32 128, 128
          %108 = vsyncadd [#allocation6], %s107
          %s110 = sshll.u32 [#allocation5], 4
          %s111 = int_to_ptr.vmem [resolvable:$true] %s110
          %113 = dma.hbm_to_vmem [thread:$0]  %s1, 128, %s111, [#allocation6]
        $region16: #{tpu_custom_call.1} parent=11 // pred_fallthru
          _
      $region12: #{tpu_custom_call.1} parent=5 // pred_fallthru
        _
      %p114 = scmp.lt.s32.totalorder %s15, 2
      // Predicated region
      $region17: #{tpu_custom_call.1} parent=5 // pred_check
        %p115 = pneg %p114
      $region18: #{tpu_custom_call.1} parent=5 // pred_check_branch
        %117 = sbr.rel (%p115) target = $region20
      $region19: #{tpu_custom_call.1} parent=5 // pred_region
        // Predicated region
        $region21: #{tpu_custom_call.1} parent=19 // pred_check
          %p118 = pneg %p35
        $region22: #{tpu_custom_call.1} parent=19 // pred_check_branch
          %120 = sbr.rel (%p118) target = $region24
        $region23: #{tpu_custom_call.1} parent=19 // pred_region
          %s121 = sand.u32 %s25, 1
          %s122 = scalar_lea.sflag [#allocation3], %s121
          %s123 = sand.u32 %s25, 1
          %s124 = smul.addr %s123, 128
          %s125 = scalar_lea.vmem [#allocation2], %s124
          %s126 = smul.u32 16, %s15
          %s128 = ssub.s32 2048, 2048
          %129 = vsyncadd %s122, %s128
          %s130 = smul.addr %s126, 128
          %s131 = scalar_lea.hbm %s0, %s130
          %s132 = sshll.u32 %s125, 4
          %s133 = int_to_ptr.vmem [resolvable:$true] %s132
          %138 = dma.hbm_to_vmem [thread:$0]  %s131, 2048, %s133, %s122, 128, 128, 8
        $region24: #{tpu_custom_call.1} parent=19 // pred_fallthru
          _
      $region20: #{tpu_custom_call.1} parent=5 // pred_fallthru
        _
      %p139 = scmp.le.s32.totalorder 1, %s15
      %p140 = scmp.lt.s32.totalorder %s15, 3
      %p141 = pnand %p139, %p140
      %p142 = pneg %p141
      // Predicated region
      $region25: #{tpu_custom_call.1} parent=5 // pred_check
        _
      $region26: #{tpu_custom_call.1} parent=5 // pred_check_branch
        %144 = sbr.rel (%p141) target = $region28
      $region27: #{tpu_custom_call.1} parent=5 // pred_region
        %s145 = ssub.s32 %s15, 1
        %s146 = sand.u32 %s28, 1
        %s147 = scalar_lea.sflag [#allocation3], %s146
        %s148 = sand.u32 %s28, 1
        %s149 = smul.addr %s148, 128
        %s150 = scalar_lea.vmem [#allocation2], %s149
        // Predicated region
        $region29: #{tpu_custom_call.1} parent=27 // pred_check
          %p151 = pneg %p41
        $region30: #{tpu_custom_call.1} parent=27 // pred_check_branch
          %153 = sbr.rel (%p151) target = $region32
        $region31: #{tpu_custom_call.1} parent=27 // pred_region
          %154 = dma.done %s147, 2048
        $region32: #{tpu_custom_call.1} parent=27 // pred_fallthru
          _
        // Predicated region
        $region33: #{tpu_custom_call.1} parent=27 // pred_check
          %p155 = pneg %p62
        $region34: #{tpu_custom_call.1} parent=27 // pred_check_branch
          %157 = sbr.rel (%p155) target = $region36
        $region35: #{tpu_custom_call.1} parent=27 // pred_region
          %158 = dma.done [#allocation6], 128
        $region36: #{tpu_custom_call.1} parent=27 // pred_fallthru
          _
        %s159 = sand.u32 %s28, 1
        %s160 = scalar_lea.sflag [#allocation3], %s159
        %s161 = sand.u32 %s28, 1
        %s162 = smul.addr %s161, 128
        %s163 = scalar_lea.vmem [#allocation2], %s162
        %p164 = pneg %p41
        %p165 = pneg %p38
        %p166 = pneg %p62
        %p167 = pneg %p59
        %p168 = pneg %p88
        %p169 = pneg %p85
        %s170 = sand.u32 %s75, 1
        %s171 = scalar_lea.sflag [#allocation4], %s170
        %s172 = sand.u32 %s75, 1
        %s173 = smul.addr %s172, 128
        %s174 = scalar_lea.vmem [#allocation7], %s173
        %s175 = smul.u32 16, %s20
        %s176 = smul.u32 16, %s20
        %v177 = vld [vmem:[%s150] sm:$0xff]
        %v178 = vld [vmem:[%s150 + $0x8] sm:$0xff]
        %v179 = vld [vmem:[%s150 + $0x10] sm:$0xff]
        %v180 = vld [vmem:[%s150 + $0x18] sm:$0xff]
        %v181 = vld [vmem:[%s150 + $0x20] sm:$0xff]
        %v182 = vld [vmem:[%s150 + $0x28] sm:$0xff]
        %v183 = vld [vmem:[%s150 + $0x30] sm:$0xff]
        %v184 = vld [vmem:[%s150 + $0x38] sm:$0xff]
        %v185 = vld [vmem:[%s150 + $0x40] sm:$0xff]
        %v186 = vld [vmem:[%s150 + $0x48] sm:$0xff]
        %v187 = vld [vmem:[%s150 + $0x50] sm:$0xff]
        %v188 = vld [vmem:[%s150 + $0x58] sm:$0xff]
        %v189 = vld [vmem:[%s150 + $0x60] sm:$0xff]
        %v190 = vld [vmem:[%s150 + $0x68] sm:$0xff]
        %v191 = vld [vmem:[%s150 + $0x70] sm:$0xff]
        %v192 = vld [vmem:[%s150 + $0x78] sm:$0xff]
        %v193 = vld [vmem:[#allocation5] sm:$0x1]
        %v194 = vlaneseq
        %v195 = vshrl.u32 %v194, 7
        %v196 = vsub.s32 0, %v195
        %v197 = vrot.slane %v193, %v196
        %v198 = vsub.f32 %v177, %v197
        %v199 = vsub.f32 %v178, %v197
        %v200 = vsub.f32 %v179, %v197
        %v201 = vsub.f32 %v180, %v197
        %v202 = vsub.f32 %v181, %v197
        %v203 = vsub.f32 %v182, %v197
        %v204 = vsub.f32 %v183, %v197
        %v205 = vsub.f32 %v184, %v197
        %v206 = vsub.f32 %v185, %v197
        %v207 = vsub.f32 %v186, %v197
        %v208 = vsub.f32 %v187, %v197
        %v209 = vsub.f32 %v188, %v197
        %v210 = vsub.f32 %v189, %v197
        %v211 = vsub.f32 %v190, %v197
        %v212 = vsub.f32 %v191, %v197
        %v213 = vsub.f32 %v192, %v197
        %v214 = vmax.f32 %v198, 0.0
        %v215 = vmax.f32 %v199, 0.0
        %v216 = vmax.f32 %v200, 0.0
        %v217 = vmax.f32 %v201, 0.0
        %v218 = vmax.f32 %v202, 0.0
        %v219 = vmax.f32 %v203, 0.0
        %v220 = vmax.f32 %v204, 0.0
        %v221 = vmax.f32 %v205, 0.0
        %v222 = vmax.f32 %v206, 0.0
        %v223 = vmax.f32 %v207, 0.0
        %v224 = vmax.f32 %v208, 0.0
        %v225 = vmax.f32 %v209, 0.0
        %v226 = vmax.f32 %v210, 0.0
        %v227 = vmax.f32 %v211, 0.0
        %v228 = vmax.f32 %v212, 0.0
        %v229 = vmax.f32 %v213, 0.0
        %s230 = sadd.s32 0, 1
        %s231 = scalar_lea.vmem [#allocation5], %s230
        %v232 = vld [vmem:[%s231] sm:$0x1]
        %v233 = vlaneseq
        %v234 = vshrl.u32 %v233, 7
        %v235 = vsub.s32 0, %v234
        %v236 = vrot.slane %v232, %v235
        %v237 = vsub.f32 %v177, %v236
        %v238 = vsub.f32 %v178, %v236
        %v239 = vsub.f32 %v179, %v236
        %v240 = vsub.f32 %v180, %v236
        %v241 = vsub.f32 %v181, %v236
        %v242 = vsub.f32 %v182, %v236
        %v243 = vsub.f32 %v183, %v236
        %v244 = vsub.f32 %v184, %v236
        %v245 = vsub.f32 %v185, %v236
        %v246 = vsub.f32 %v186, %v236
        %v247 = vsub.f32 %v187, %v236
        %v248 = vsub.f32 %v188, %v236
        %v249 = vsub.f32 %v189, %v236
        %v250 = vsub.f32 %v190, %v236
        %v251 = vsub.f32 %v191, %v236
        %v252 = vsub.f32 %v192, %v236
        %v253 = vmax.f32 %v237, 0.0
        %v254 = vmax.f32 %v238, 0.0
        %v255 = vmax.f32 %v239, 0.0
        %v256 = vmax.f32 %v240, 0.0
        %v257 = vmax.f32 %v241, 0.0
        %v258 = vmax.f32 %v242, 0.0
        %v259 = vmax.f32 %v243, 0.0
        %v260 = vmax.f32 %v244, 0.0
        %v261 = vmax.f32 %v245, 0.0
        %v262 = vmax.f32 %v246, 0.0
        %v263 = vmax.f32 %v247, 0.0
        %v264 = vmax.f32 %v248, 0.0
        %v265 = vmax.f32 %v249, 0.0
        %v266 = vmax.f32 %v250, 0.0
        %v267 = vmax.f32 %v251, 0.0
        %v268 = vmax.f32 %v252, 0.0
        %v269 = vadd.f32 %v214, %v253
        %v270 = vadd.f32 %v215, %v254
        %v271 = vadd.f32 %v216, %v255
        %v272 = vadd.f32 %v217, %v256
        %v273 = vadd.f32 %v218, %v257
        %v274 = vadd.f32 %v219, %v258
        %v275 = vadd.f32 %v220, %v259
        %v276 = vadd.f32 %v221, %v260
        %v277 = vadd.f32 %v222, %v261
        %v278 = vadd.f32 %v223, %v262
        %v279 = vadd.f32 %v224, %v263
        %v280 = vadd.f32 %v225, %v264
        %v281 = vadd.f32 %v226, %v265
        %v282 = vadd.f32 %v227, %v266
        %v283 = vadd.f32 %v228, %v267
        %v284 = vadd.f32 %v229, %v268
        %s285 = sadd.s32 0, 2
        %s286 = scalar_lea.vmem [#allocation5], %s285
        %v287 = vld [vmem:[%s286] sm:$0x1]
        %v288 = vlaneseq
        %v289 = vshrl.u32 %v288, 7
        %v290 = vsub.s32 0, %v289
        %v291 = vrot.slane %v287, %v290
        %v292 = vsub.f32 %v177, %v291
        %v293 = vsub.f32 %v178, %v291
        %v294 = vsub.f32 %v179, %v291
        %v295 = vsub.f32 %v180, %v291
        %v296 = vsub.f32 %v181, %v291
        %v297 = vsub.f32 %v182, %v291
        %v298 = vsub.f32 %v183, %v291
        %v299 = vsub.f32 %v184, %v291
        %v300 = vsub.f32 %v185, %v291
        %v301 = vsub.f32 %v186, %v291
        %v302 = vsub.f32 %v187, %v291
        %v303 = vsub.f32 %v188, %v291
        %v304 = vsub.f32 %v189, %v291
        %v305 = vsub.f32 %v190, %v291
        %v306 = vsub.f32 %v191, %v291
        %v307 = vsub.f32 %v192, %v291
        %v308 = vmax.f32 %v292, 0.0
        %v309 = vmax.f32 %v293, 0.0
        %v310 = vmax.f32 %v294, 0.0
        %v311 = vmax.f32 %v295, 0.0
        %v312 = vmax.f32 %v296, 0.0
        %v313 = vmax.f32 %v297, 0.0
        %v314 = vmax.f32 %v298, 0.0
        %v315 = vmax.f32 %v299, 0.0
        %v316 = vmax.f32 %v300, 0.0
        %v317 = vmax.f32 %v301, 0.0
        %v318 = vmax.f32 %v302, 0.0
        %v319 = vmax.f32 %v303, 0.0
        %v320 = vmax.f32 %v304, 0.0
        %v321 = vmax.f32 %v305, 0.0
        %v322 = vmax.f32 %v306, 0.0
        %v323 = vmax.f32 %v307, 0.0
        %v324 = vadd.f32 %v269, %v308
        %v325 = vadd.f32 %v270, %v309
        %v326 = vadd.f32 %v271, %v310
        %v327 = vadd.f32 %v272, %v311
        %v328 = vadd.f32 %v273, %v312
        %v329 = vadd.f32 %v274, %v313
        %v330 = vadd.f32 %v275, %v314
        %v331 = vadd.f32 %v276, %v315
        %v332 = vadd.f32 %v277, %v316
        %v333 = vadd.f32 %v278, %v317
        %v334 = vadd.f32 %v279, %v318
        %v335 = vadd.f32 %v280, %v319
        %v336 = vadd.f32 %v281, %v320
        %v337 = vadd.f32 %v282, %v321
        %v338 = vadd.f32 %v283, %v322
        %v339 = vadd.f32 %v284, %v323
        %s340 = sadd.s32 0, 3
        %s341 = scalar_lea.vmem [#allocation5], %s340
        %v342 = vld [vmem:[%s341] sm:$0x1]
        %v343 = vlaneseq
        %v344 = vshrl.u32 %v343, 7
        %v345 = vsub.s32 0, %v344
        %v346 = vrot.slane %v342, %v345
        %v347 = vsub.f32 %v177, %v346
        %v348 = vsub.f32 %v178, %v346
        %v349 = vsub.f32 %v179, %v346
        %v350 = vsub.f32 %v180, %v346
        %v351 = vsub.f32 %v181, %v346
        %v352 = vsub.f32 %v182, %v346
        %v353 = vsub.f32 %v183, %v346
        %v354 = vsub.f32 %v184, %v346
        %v355 = vsub.f32 %v185, %v346
        %v356 = vsub.f32 %v186, %v346
        %v357 = vsub.f32 %v187, %v346
        %v358 = vsub.f32 %v188, %v346
        %v359 = vsub.f32 %v189, %v346
        %v360 = vsub.f32 %v190, %v346
        %v361 = vsub.f32 %v191, %v346
        %v362 = vsub.f32 %v192, %v346
        %v363 = vmax.f32 %v347, 0.0
        %v364 = vmax.f32 %v348, 0.0
        %v365 = vmax.f32 %v349, 0.0
        %v366 = vmax.f32 %v350, 0.0
        %v367 = vmax.f32 %v351, 0.0
        %v368 = vmax.f32 %v352, 0.0
        %v369 = vmax.f32 %v353, 0.0
        %v370 = vmax.f32 %v354, 0.0
        %v371 = vmax.f32 %v355, 0.0
        %v372 = vmax.f32 %v356, 0.0
        %v373 = vmax.f32 %v357, 0.0
        %v374 = vmax.f32 %v358, 0.0
        %v375 = vmax.f32 %v359, 0.0
        %v376 = vmax.f32 %v360, 0.0
        %v377 = vmax.f32 %v361, 0.0
        %v378 = vmax.f32 %v362, 0.0
        %v379 = vadd.f32 %v324, %v363
        %v380 = vadd.f32 %v325, %v364
        %v381 = vadd.f32 %v326, %v365
        %v382 = vadd.f32 %v327, %v366
        %v383 = vadd.f32 %v328, %v367
        %v384 = vadd.f32 %v329, %v368
        %v385 = vadd.f32 %v330, %v369
        %v386 = vadd.f32 %v331, %v370
        %v387 = vadd.f32 %v332, %v371
        %v388 = vadd.f32 %v333, %v372
        %v389 = vadd.f32 %v334, %v373
        %v390 = vadd.f32 %v335, %v374
        %v391 = vadd.f32 %v336, %v375
        %v392 = vadd.f32 %v337, %v376
        %v393 = vadd.f32 %v338, %v377
        %v394 = vadd.f32 %v339, %v378
        %s395 = sadd.s32 0, 4
        %s396 = scalar_lea.vmem [#allocation5], %s395
        %v397 = vld [vmem:[%s396] sm:$0x1]
        %v398 = vlaneseq
        %v399 = vshrl.u32 %v398, 7
        %v400 = vsub.s32 0, %v399
        %v401 = vrot.slane %v397, %v400
        %v402 = vsub.f32 %v177, %v401
        %v403 = vsub.f32 %v178, %v401
        %v404 = vsub.f32 %v179, %v401
        %v405 = vsub.f32 %v180, %v401
        %v406 = vsub.f32 %v181, %v401
        %v407 = vsub.f32 %v182, %v401
        %v408 = vsub.f32 %v183, %v401
        %v409 = vsub.f32 %v184, %v401
        %v410 = vsub.f32 %v185, %v401
        %v411 = vsub.f32 %v186, %v401
        %v412 = vsub.f32 %v187, %v401
        %v413 = vsub.f32 %v188, %v401
        %v414 = vsub.f32 %v189, %v401
        %v415 = vsub.f32 %v190, %v401
        %v416 = vsub.f32 %v191, %v401
        %v417 = vsub.f32 %v192, %v401
        %v418 = vmax.f32 %v402, 0.0
        %v419 = vmax.f32 %v403, 0.0
        %v420 = vmax.f32 %v404, 0.0
        %v421 = vmax.f32 %v405, 0.0
        %v422 = vmax.f32 %v406, 0.0
        %v423 = vmax.f32 %v407, 0.0
        %v424 = vmax.f32 %v408, 0.0
        %v425 = vmax.f32 %v409, 0.0
        %v426 = vmax.f32 %v410, 0.0
        %v427 = vmax.f32 %v411, 0.0
        %v428 = vmax.f32 %v412, 0.0
        %v429 = vmax.f32 %v413, 0.0
        %v430 = vmax.f32 %v414, 0.0
        %v431 = vmax.f32 %v415, 0.0
        %v432 = vmax.f32 %v416, 0.0
        %v433 = vmax.f32 %v417, 0.0
        %v434 = vadd.f32 %v379, %v418
        %v435 = vadd.f32 %v380, %v419
        %v436 = vadd.f32 %v381, %v420
        %v437 = vadd.f32 %v382, %v421
        %v438 = vadd.f32 %v383, %v422
        %v439 = vadd.f32 %v384, %v423
        %v440 = vadd.f32 %v385, %v424
        %v441 = vadd.f32 %v386, %v425
        %v442 = vadd.f32 %v387, %v426
        %v443 = vadd.f32 %v388, %v427
        %v444 = vadd.f32 %v389, %v428
        %v445 = vadd.f32 %v390, %v429
        %v446 = vadd.f32 %v391, %v430
        %v447 = vadd.f32 %v392, %v431
        %v448 = vadd.f32 %v393, %v432
        %v449 = vadd.f32 %v394, %v433
        %s450 = sadd.s32 0, 5
        %s451 = scalar_lea.vmem [#allocation5], %s450
        %v452 = vld [vmem:[%s451] sm:$0x1]
        %v453 = vlaneseq
        %v454 = vshrl.u32 %v453, 7
        %v455 = vsub.s32 0, %v454
        %v456 = vrot.slane %v452, %v455
        %v457 = vsub.f32 %v177, %v456
        %v458 = vsub.f32 %v178, %v456
        %v459 = vsub.f32 %v179, %v456
        %v460 = vsub.f32 %v180, %v456
        %v461 = vsub.f32 %v181, %v456
        %v462 = vsub.f32 %v182, %v456
        %v463 = vsub.f32 %v183, %v456
        %v464 = vsub.f32 %v184, %v456
        %v465 = vsub.f32 %v185, %v456
        %v466 = vsub.f32 %v186, %v456
        %v467 = vsub.f32 %v187, %v456
        %v468 = vsub.f32 %v188, %v456
        %v469 = vsub.f32 %v189, %v456
        %v470 = vsub.f32 %v190, %v456
        %v471 = vsub.f32 %v191, %v456
        %v472 = vsub.f32 %v192, %v456
        %v473 = vmax.f32 %v457, 0.0
        %v474 = vmax.f32 %v458, 0.0
        %v475 = vmax.f32 %v459, 0.0
        %v476 = vmax.f32 %v460, 0.0
        %v477 = vmax.f32 %v461, 0.0
        %v478 = vmax.f32 %v462, 0.0
        %v479 = vmax.f32 %v463, 0.0
        %v480 = vmax.f32 %v464, 0.0
        %v481 = vmax.f32 %v465, 0.0
        %v482 = vmax.f32 %v466, 0.0
        %v483 = vmax.f32 %v467, 0.0
        %v484 = vmax.f32 %v468, 0.0
        %v485 = vmax.f32 %v469, 0.0
        %v486 = vmax.f32 %v470, 0.0
        %v487 = vmax.f32 %v471, 0.0
        %v488 = vmax.f32 %v472, 0.0
        %v489 = vadd.f32 %v434, %v473
        %v490 = vadd.f32 %v435, %v474
        %v491 = vadd.f32 %v436, %v475
        %v492 = vadd.f32 %v437, %v476
        %v493 = vadd.f32 %v438, %v477
        %v494 = vadd.f32 %v439, %v478
        %v495 = vadd.f32 %v440, %v479
        %v496 = vadd.f32 %v441, %v480
        %v497 = vadd.f32 %v442, %v481
        %v498 = vadd.f32 %v443, %v482
        %v499 = vadd.f32 %v444, %v483
        %v500 = vadd.f32 %v445, %v484
        %v501 = vadd.f32 %v446, %v485
        %v502 = vadd.f32 %v447, %v486
        %v503 = vadd.f32 %v448, %v487
        %v504 = vadd.f32 %v449, %v488
        %s505 = sadd.s32 0, 6
        %s506 = scalar_lea.vmem [#allocation5], %s505
        %v507 = vld [vmem:[%s506] sm:$0x1]
        %v508 = vlaneseq
        %v509 = vshrl.u32 %v508, 7
        %v510 = vsub.s32 0, %v509
        %v511 = vrot.slane %v507, %v510
        %v512 = vsub.f32 %v177, %v511
        %v513 = vsub.f32 %v178, %v511
        %v514 = vsub.f32 %v179, %v511
        %v515 = vsub.f32 %v180, %v511
        %v516 = vsub.f32 %v181, %v511
        %v517 = vsub.f32 %v182, %v511
        %v518 = vsub.f32 %v183, %v511
        %v519 = vsub.f32 %v184, %v511
        %v520 = vsub.f32 %v185, %v511
        %v521 = vsub.f32 %v186, %v511
        %v522 = vsub.f32 %v187, %v511
        %v523 = vsub.f32 %v188, %v511
        %v524 = vsub.f32 %v189, %v511
        %v525 = vsub.f32 %v190, %v511
        %v526 = vsub.f32 %v191, %v511
        %v527 = vsub.f32 %v192, %v511
        %v528 = vmax.f32 %v512, 0.0
        %v529 = vmax.f32 %v513, 0.0
        %v530 = vmax.f32 %v514, 0.0
        %v531 = vmax.f32 %v515, 0.0
        %v532 = vmax.f32 %v516, 0.0
        %v533 = vmax.f32 %v517, 0.0
        %v534 = vmax.f32 %v518, 0.0
        %v535 = vmax.f32 %v519, 0.0
        %v536 = vmax.f32 %v520, 0.0
        %v537 = vmax.f32 %v521, 0.0
        %v538 = vmax.f32 %v522, 0.0
        %v539 = vmax.f32 %v523, 0.0
        %v540 = vmax.f32 %v524, 0.0
        %v541 = vmax.f32 %v525, 0.0
        %v542 = vmax.f32 %v526, 0.0
        %v543 = vmax.f32 %v527, 0.0
        %v544 = vadd.f32 %v489, %v528
        %v545 = vadd.f32 %v490, %v529
        %v546 = vadd.f32 %v491, %v530
        %v547 = vadd.f32 %v492, %v531
        %v548 = vadd.f32 %v493, %v532
        %v549 = vadd.f32 %v494, %v533
        %v550 = vadd.f32 %v495, %v534
        %v551 = vadd.f32 %v496, %v535
        %v552 = vadd.f32 %v497, %v536
        %v553 = vadd.f32 %v498, %v537
        %v554 = vadd.f32 %v499, %v538
        %v555 = vadd.f32 %v500, %v539
        %v556 = vadd.f32 %v501, %v540
        %v557 = vadd.f32 %v502, %v541
        %v558 = vadd.f32 %v503, %v542
        %v559 = vadd.f32 %v504, %v543
        %s560 = sadd.s32 0, 7
        %s561 = scalar_lea.vmem [#allocation5], %s560
        %v562 = vld [vmem:[%s561] sm:$0x1]
        %v563 = vlaneseq
        %v564 = vshrl.u32 %v563, 7
        %v565 = vsub.s32 0, %v564
        %v566 = vrot.slane %v562, %v565
        %v567 = vsub.f32 %v177, %v566
        %v568 = vsub.f32 %v178, %v566
        %v569 = vsub.f32 %v179, %v566
        %v570 = vsub.f32 %v180, %v566
        %v571 = vsub.f32 %v181, %v566
        %v572 = vsub.f32 %v182, %v566
        %v573 = vsub.f32 %v183, %v566
        %v574 = vsub.f32 %v184, %v566
        %v575 = vsub.f32 %v185, %v566
        %v576 = vsub.f32 %v186, %v566
        %v577 = vsub.f32 %v187, %v566
        %v578 = vsub.f32 %v188, %v566
        %v579 = vsub.f32 %v189, %v566
        %v580 = vsub.f32 %v190, %v566
        %v581 = vsub.f32 %v191, %v566
        %v582 = vsub.f32 %v192, %v566
        %v583 = vmax.f32 %v567, 0.0
        %v584 = vmax.f32 %v568, 0.0
        %v585 = vmax.f32 %v569, 0.0
        %v586 = vmax.f32 %v570, 0.0
        %v587 = vmax.f32 %v571, 0.0
        %v588 = vmax.f32 %v572, 0.0
        %v589 = vmax.f32 %v573, 0.0
        %v590 = vmax.f32 %v574, 0.0
        %v591 = vmax.f32 %v575, 0.0
        %v592 = vmax.f32 %v576, 0.0
        %v593 = vmax.f32 %v577, 0.0
        %v594 = vmax.f32 %v578, 0.0
        %v595 = vmax.f32 %v579, 0.0
        %v596 = vmax.f32 %v580, 0.0
        %v597 = vmax.f32 %v581, 0.0
        %v598 = vmax.f32 %v582, 0.0
        %v599 = vadd.f32 %v544, %v583
        %v600 = vadd.f32 %v545, %v584
        %v601 = vadd.f32 %v546, %v585
        %v602 = vadd.f32 %v547, %v586
        %v603 = vadd.f32 %v548, %v587
        %v604 = vadd.f32 %v549, %v588
        %v605 = vadd.f32 %v550, %v589
        %v606 = vadd.f32 %v551, %v590
        %v607 = vadd.f32 %v552, %v591
        %v608 = vadd.f32 %v553, %v592
        %v609 = vadd.f32 %v554, %v593
        %v610 = vadd.f32 %v555, %v594
        %v611 = vadd.f32 %v556, %v595
        %v612 = vadd.f32 %v557, %v596
        %v613 = vadd.f32 %v558, %v597
        %v614 = vadd.f32 %v559, %v598
        %v615 = vadd.f32 %v599, 0.0
        %v616 = vadd.f32 %v600, 0.0
        %v617 = vadd.f32 %v601, 0.0
        %v618 = vadd.f32 %v602, 0.0
        %v619 = vadd.f32 %v603, 0.0
        %v620 = vadd.f32 %v604, 0.0
        %v621 = vadd.f32 %v605, 0.0
        %v622 = vadd.f32 %v606, 0.0
        %v623 = vadd.f32 %v607, 0.0
        %v624 = vadd.f32 %v608, 0.0
        %v625 = vadd.f32 %v609, 0.0
        %v626 = vadd.f32 %v610, 0.0
        %v627 = vadd.f32 %v611, 0.0
        %v628 = vadd.f32 %v612, 0.0
        %v629 = vadd.f32 %v613, 0.0
        %v630 = vadd.f32 %v614, 0.0
        %631 = vst [vmem:[%s174] sm:$0xff] %v615
        %632 = vst [vmem:[%s174 + $0x8] sm:$0xff] %v616
        %633 = vst [vmem:[%s174 + $0x10] sm:$0xff] %v617
        %634 = vst [vmem:[%s174 + $0x18] sm:$0xff] %v618
        %635 = vst [vmem:[%s174 + $0x20] sm:$0xff] %v619
        %636 = vst [vmem:[%s174 + $0x28] sm:$0xff] %v620
        %637 = vst [vmem:[%s174 + $0x30] sm:$0xff] %v621
        %638 = vst [vmem:[%s174 + $0x38] sm:$0xff] %v622
        %639 = vst [vmem:[%s174 + $0x40] sm:$0xff] %v623
        %640 = vst [vmem:[%s174 + $0x48] sm:$0xff] %v624
        %641 = vst [vmem:[%s174 + $0x50] sm:$0xff] %v625
        %642 = vst [vmem:[%s174 + $0x58] sm:$0xff] %v626
        %643 = vst [vmem:[%s174 + $0x60] sm:$0xff] %v627
        %644 = vst [vmem:[%s174 + $0x68] sm:$0xff] %v628
        %645 = vst [vmem:[%s174 + $0x70] sm:$0xff] %v629
        %646 = vst [vmem:[%s174 + $0x78] sm:$0xff] %v630
        %s647 = sand.u32 %s75, 1
        %s648 = scalar_lea.sflag [#allocation4], %s647
        %s649 = sand.u32 %s75, 1
        %s650 = smul.addr %s649, 128
        %s651 = scalar_lea.vmem [#allocation7], %s650
        // Predicated region
        $region37: #{tpu_custom_call.1} parent=27 // pred_check
          %p652 = pneg %p85
        $region38: #{tpu_custom_call.1} parent=27 // pred_check_branch
          %654 = sbr.rel (%p652) target = $region40
        $region39: #{tpu_custom_call.1} parent=27 // pred_region
          %s655 = smul.u32 16, %s20
          %s657 = ssub.s32 2048, 2048
          %658 = vsyncadd %s648, %s657
          %s659 = smul.addr %s655, 128
          %s660 = scalar_lea.hbm %s2, %s659
          %s661 = sshll.u32 %s651, 4
          %s662 = int_to_ptr.vmem [resolvable:$true] %s661
          %667 = dma.vmem_to_hbm [thread:$0]  %s662, 2048, %s660, %s648, 128, 128, 8
        $region40: #{tpu_custom_call.1} parent=27 // pred_fallthru
          _
      $region28: #{tpu_custom_call.1} parent=5 // pred_fallthru
        _
      %p668 = scmp.le.s32.totalorder 2, %s15
      // Predicated region
      $region41: #{tpu_custom_call.1} parent=5 // pred_check
        %p669 = pneg %p668
      $region42: #{tpu_custom_call.1} parent=5 // pred_check_branch
        %671 = sbr.rel (%p669) target = $region44
      $region43: #{tpu_custom_call.1} parent=5 // pred_region
        %s672 = ssub.s32 %s15, 2
        // Predicated region
        $region45: #{tpu_custom_call.1} parent=43 // pred_check
          %p673 = pneg %p91
        $region46: #{tpu_custom_call.1} parent=43 // pred_check_branch
          %675 = sbr.rel (%p673) target = $region48
        $region47: #{tpu_custom_call.1} parent=43 // pred_region
          %s676 = sand.u32 %s76, 1
          %s677 = scalar_lea.sflag [#allocation4], %s676
          %s678 = sand.u32 %s76, 1
          %s679 = smul.addr %s678, 128
          %s680 = scalar_lea.vmem [#allocation7], %s679
          %681 = dma.done %s677, 2048
        $region48: #{tpu_custom_call.1} parent=43 // pred_fallthru
          _
      $region44: #{tpu_custom_call.1} parent=5 // pred_fallthru
        _
    $region6: #{tpu_custom_call.1} parent=1 // loop_footer
      %s19 = sadd.s32 1, %s15
    $region7: #{tpu_custom_call.1} parent=1 // loop_footer_branch
      %14 = sbr.rel target = $region3
    $region8: #{tpu_custom_call.1} parent=1 // loop_exit
      _
    %682 = vsyncpa [#allocation3], 1
    %s683 = scalar_lea.sflag [#allocation3], 1
    %684 = vsyncpa %s683, 1
    %685 = vsyncpa [#allocation6], 1
    %686 = vsyncpa [#allocation4], 1
    %s687 = scalar_lea.sflag [#allocation4], 1
    %688 = vsyncpa %s687, 1

</llo_original>
